<compile_context>
chip_gen: v5e
topology: v5e:2x2
jax: 0.10.0
libtpu: 0.0.40
codegen_flags: <defaults>
</compile_context>

<pallas_src>
import functools

import jax
import jax.numpy as jnp
from jax.experimental import pallas as pl
from jax.experimental.pallas import tpu as pltpu


def _layernorm_cf_kernel(x_ref, w_ref, b_ref, o_ref, *, eps, inv_c):
    # x_ref / o_ref: (C, TILE_HW) tile; w_ref / b_ref: (C, 1)
    x = x_ref[...].astype(jnp.float32)                 # (C, THW)
    w = w_ref[...].astype(jnp.float32)                 # (C, 1)
    b = b_ref[...].astype(jnp.float32)                 # (C, 1)

    # One-pass statistics over the channel (sublane) axis.
    s1 = jnp.sum(x, axis=0, keepdims=True)             # (1, THW)
    s2 = jnp.sum(x * x, axis=0, keepdims=True)         # (1, THW)
    mean = s1 * inv_c
    var = s2 * inv_c - mean * mean
    var = jnp.maximum(var, 0.0)                        # guard tiny negative fp error
    inv_std = jax.lax.rsqrt(var + eps)

    o_ref[...] = (w * ((x - mean) * inv_std) + b).astype(o_ref.dtype)


def layernorm_channels_first(x, weight, bias, eps=1e-6, tile_hw=None,
                             vmem_budget_bytes=8 * 1024 * 1024):
    """LayerNorm over the channel dim of an NCHW tensor (channels_first)."""
    N, C, H, W = x.shape
    HW = H * W
    x2 = x.reshape(N, C, HW)          # free: no data movement
    w2 = weight.reshape(C, 1)
    b2 = bias.reshape(C, 1)

    if tile_hw is None:
        # Lane-dense spatial tile: a multiple of 128, sized so the
        # double-buffered (in + out) VMEM footprint stays within budget
        # (safe for v7x's 64 MiB VMEM / 32 MiB default scoped limit).
        per_lane_bytes = 2 * 2 * C * x.dtype.itemsize      # 2 bufs x (in+out)
        cap = max(128, (vmem_budget_bytes // per_lane_bytes) // 128 * 128)
        cap = min(cap, 2048)                                # sweep point 512-2048
        tile_hw = min(cap, pl.cdiv(HW, 128) * 128)          # don't exceed padded HW

    grid = (N, pl.cdiv(HW, tile_hw))

    kernel = functools.partial(_layernorm_cf_kernel, eps=float(eps),
                               inv_c=1.0 / float(C))

    out = pl.pallas_call(
        kernel,
        out_shape=jax.ShapeDtypeStruct((N, C, HW), x.dtype),
        grid_spec=pltpu.PrefetchScalarGridSpec(
            num_scalar_prefetch=0,
            grid=grid,
            in_specs=[
                pl.BlockSpec((pl.Squeezed(), C, tile_hw), lambda n, s: (n, 0, s)),
                pl.BlockSpec((C, 1), lambda n, s: (0, 0)),
                pl.BlockSpec((C, 1), lambda n, s: (0, 0)),
            ],
            out_specs=pl.BlockSpec((pl.Squeezed(), C, tile_hw),
                                   lambda n, s: (n, 0, s)),
        ),
        compiler_params=pltpu.CompilerParams(
            dimension_semantics=("parallel", "parallel"),
        ),
    )(x2, w2, b2)

    return out.reshape(N, C, H, W)


def _reference(x, weight, bias, eps=1e-6):
    # Pure-JAX reference mirroring the PyTorch channels_first branch.
    u = jnp.mean(x, axis=1, keepdims=True)
    s = jnp.mean((x - u) ** 2, axis=1, keepdims=True)
    xn = (x - u) / jnp.sqrt(s + eps)
    return weight[None, :, None, None] * xn + bias[None, :, None, None]


if __name__ == "__main__":
    key = jax.random.PRNGKey(0)
    N, C, H, W = 2, 4, 16, 16

    x = jax.random.normal(key, (N, C, H, W), dtype=jnp.float32)
    # Deterministic parameter init matching nn.Parameter(torch.ones/zeros(C)).
    weight = jnp.ones((C,), dtype=jnp.float32)
    bias = jnp.zeros((C,), dtype=jnp.float32)

    y = layernorm_channels_first(x, weight, bias, eps=1e-6)
    y = jax.block_until_ready(y)

    y_ref = _reference(x, weight, bias, eps=1e-6)
    assert jnp.allclose(y, y_ref, atol=1e-5, rtol=1e-5), "mismatch vs reference"

    print("KERNEL_OK")
</pallas_src>

<mosaic_0001>
module attributes {stable_mosaic.version = 11 : i64} {
  func.func @_layernorm_cf_kernel(%arg0: i32, %arg1: i32, %arg2: memref<1x4x256xf32, #tpu.memory_space<vmem>>, %arg3: memref<4x1xf32, #tpu.memory_space<vmem>>, %arg4: memref<4x1xf32, #tpu.memory_space<vmem>>, %arg5: memref<1x4x256xf32, #tpu.memory_space<vmem>>) attributes {dimension_semantics = [#tpu.dimension_semantics<parallel>, #tpu.dimension_semantics<parallel>], iteration_bounds = array<i64: 2, 1>, scalar_prefetch = 0 : i64, scratch_operands = 0 : i64, tpu.core_type = #tpu.core_type<tc>, window_params = [{transform_indices = @transform_0, window_bounds = array<i64: 1, 4, 256>}, {pipeline_mode = #tpu.pipeline_mode<synchronous>, transform_indices = @transform_1, window_bounds = array<i64: 4, 1>}, {pipeline_mode = #tpu.pipeline_mode<synchronous>, transform_indices = @transform_2, window_bounds = array<i64: 4, 1>}, {transform_indices = @transform_3, window_bounds = array<i64: 1, 4, 256>}]} {
    %c0 = arith.constant 0 : index
    %c0_0 = arith.constant 0 : index
    %c0_1 = arith.constant 0 : index
    %0 = vector.load %arg2[%c0, %c0_0, %c0_1] : memref<1x4x256xf32, #tpu.memory_space<vmem>>, vector<1x4x256xf32>
    %1 = vector.shape_cast %0 : vector<1x4x256xf32> to vector<4x256xf32>
    %c0_2 = arith.constant 0 : index
    %c0_3 = arith.constant 0 : index
    %2 = vector.load %arg3[%c0_2, %c0_3] : memref<4x1xf32, #tpu.memory_space<vmem>>, vector<4x1xf32>
    %c0_4 = arith.constant 0 : index
    %c0_5 = arith.constant 0 : index
    %3 = vector.load %arg4[%c0_4, %c0_5] : memref<4x1xf32, #tpu.memory_space<vmem>>, vector<4x1xf32>
    %cst = arith.constant dense<0.000000e+00> : vector<256xf32>
    %4 = vector.multi_reduction <add>, %1, %cst [0] : vector<4x256xf32> to vector<256xf32>
    %5 = vector.shape_cast %4 : vector<256xf32> to vector<1x256xf32>
    %6 = arith.mulf %1, %1 : vector<4x256xf32>
    %cst_6 = arith.constant dense<0.000000e+00> : vector<256xf32>
    %7 = vector.multi_reduction <add>, %6, %cst_6 [0] : vector<4x256xf32> to vector<256xf32>
    %8 = vector.shape_cast %7 : vector<256xf32> to vector<1x256xf32>
    %cst_7 = arith.constant 2.500000e-01 : f32
    %9 = vector.broadcast %cst_7 : f32 to vector<1x256xf32>
    %10 = arith.mulf %5, %9 : vector<1x256xf32>
    %cst_8 = arith.constant 2.500000e-01 : f32
    %11 = vector.broadcast %cst_8 : f32 to vector<1x256xf32>
    %12 = arith.mulf %8, %11 : vector<1x256xf32>
    %13 = arith.mulf %10, %10 : vector<1x256xf32>
    %14 = arith.subf %12, %13 : vector<1x256xf32>
    %cst_9 = arith.constant 0.000000e+00 : f32
    %15 = vector.broadcast %cst_9 : f32 to vector<1x256xf32>
    %16 = arith.maximumf %14, %15 : vector<1x256xf32>
    %cst_10 = arith.constant 9.99999997E-7 : f32
    %17 = vector.broadcast %cst_10 : f32 to vector<1x256xf32>
    %18 = arith.addf %16, %17 : vector<1x256xf32>
    %19 = math.rsqrt %18 : vector<1x256xf32>
    %20 = vector.broadcast %10 : vector<1x256xf32> to vector<4x256xf32>
    %21 = arith.subf %1, %20 : vector<4x256xf32>
    %22 = vector.broadcast %19 : vector<1x256xf32> to vector<4x256xf32>
    %23 = arith.mulf %21, %22 : vector<4x256xf32>
    %24 = vector.broadcast %2 : vector<4x1xf32> to vector<4x256xf32>
    %25 = arith.mulf %24, %23 : vector<4x256xf32>
    %26 = vector.broadcast %3 : vector<4x1xf32> to vector<4x256xf32>
    %27 = arith.addf %25, %26 : vector<4x256xf32>
    %c0_11 = arith.constant 0 : index
    %c0_12 = arith.constant 0 : index
    %c0_13 = arith.constant 0 : index
    %28 = vector.load %arg5[%c0_11, %c0_12, %c0_13] : memref<1x4x256xf32, #tpu.memory_space<vmem>>, vector<1x4x256xf32>
    %29 = vector.shape_cast %28 : vector<1x4x256xf32> to vector<4x256xf32>
    %30 = vector.shape_cast %27 : vector<4x256xf32> to vector<1x4x256xf32>
    tpu.vector_store %arg5[%c0_11, %c0_12, %c0_13], %30 {strides = array<i32>} : memref<1x4x256xf32, #tpu.memory_space<vmem>>, vector<1x4x256xf32>,
    return
  }
  func.func @transform_0(%arg0: i32, %arg1: i32) -> (i32, i32, i32) {
    %c0_i32 = arith.constant 0 : i32
    %c0_i32_0 = arith.constant 0 : i32
    return %arg0, %c0_i32, %arg1 : i32, i32, i32
  }
  func.func @transform_1(%arg0: i32, %arg1: i32) -> (i32, i32) {
    %c0_i32 = arith.constant 0 : i32
    %c0_i32_0 = arith.constant 0 : i32
    %c0_i32_1 = arith.constant 0 : i32
    return %c0_i32, %c0_i32_0 : i32, i32
  }
  func.func @transform_2(%arg0: i32, %arg1: i32) -> (i32, i32) {
    %c0_i32 = arith.constant 0 : i32
    %c0_i32_0 = arith.constant 0 : i32
    %c0_i32_1 = arith.constant 0 : i32
    return %c0_i32, %c0_i32_0 : i32, i32
  }
  func.func @transform_3(%arg0: i32, %arg1: i32) -> (i32, i32, i32) {
    %c0_i32 = arith.constant 0 : i32
    %c0_i32_0 = arith.constant 0 : i32
    return %arg0, %c0_i32, %arg1 : i32, i32, i32
  }
}

</mosaic_0001>

<llo_original>
// kernel: tpu_custom_call.1
$region0: #{tpu_custom_call.1}
  #allocation0 [shape = 'u32[]', space=smem, size = 0x4, offset = 0x4, fixed_abs, tag = 'smem constant byte address 0x4 - core index']
  #allocation1 [shape = 'u32[72,128]{1,0:T(1,128)}', space=vmem, size = 0x9000, scoped, tag = 'internal scratch']
  %s0 = inlined_call_operand.hbm [shape: f32[2,4,256], index: 0, kind: input, shape index: {}]
  %s1 = inlined_call_operand.vmem [shape: f32[4,1], index: 1, kind: input, shape index: {}]
  %s2 = inlined_call_operand.vmem [shape: f32[4,1], index: 2, kind: input, shape index: {}]
  %s3 = inlined_call_operand.hbm [shape: f32[2,4,256], index: 3, kind: output, shape index: {}]
  %s4 = sld [smem:[#allocation0]]
  $region49: #{tpu_custom_call.1} parent=0
    _
  %s6 = ssub.s32 1, %s4
  %s7 = scalar_select 0, %s6, %s4
  $region1: #{tpu_custom_call.1} parent=0
    #allocation2 [shape = 'u8[8192]{0}', space=vmem, size = 0x2000, scoped, tag = 'input window, operand 0']
    #allocation3 [shape = 's32[2]{0}', space=sflag, size = 0x8, scoped, tag = 'scoped memory for tpu_custom_call.1']
    #allocation4 [shape = 's32[2]{0}', space=sflag, size = 0x8, scoped, tag = 'scoped memory for tpu_custom_call.1']
    #allocation5 [shape = 'u8[8192]{0}', space=vmem, size = 0x2000, scoped, tag = 'output window, operand 0']
    %8 = vsyncpa [#allocation3], 0
    %s9 = scalar_lea.sflag [#allocation3], 1
    %10 = vsyncpa %s9, 0
    %11 = vsyncpa [#allocation4], 0
    %s12 = scalar_lea.sflag [#allocation4], 1
    %13 = vsyncpa %s12, 0
    loop: start=0, step=1, limit=4
    $region2: #{tpu_custom_call.1} parent=1 // loop_pre_header
      _
    $region3: #{tpu_custom_call.1} parent=1 // loop_header
      %s15 = sphi 0, %s19
      %p16 = scmp.ge.s32.totalorder %s15, 4
      %s22 = sphi 0, %s34
      %s23 = sphi 0, %s30
      %s24 = sphi 0, %s22
      %s25 = sphi 0, %s23
      %s26 = sphi 0, %s24
      %s27 = sphi 0, %s25
      %s39 = sphi 0, %s41
      %s42 = sphi 0, %s39
      %s43 = sphi 0, %s42
      %s59 = sphi 0, %s43
      %s63 = sphi 0, %s63
      %s65 = sphi 0, %s63
      %s66 = sphi 0, %s65
      %s80 = sphi 0, %s66
      %s84 = sphi 0, %s84
      %s86 = sphi 0, %s84
      %s87 = sphi 0, %s86
      %s101 = sphi 0, %s87
      %s109 = sphi 0, %s111
      %s112 = sphi 0, %s109
      %s113 = sphi 0, %s112
      %s129 = sphi 0, %s113
    $region4: #{tpu_custom_call.1} parent=1 // loop_header_branch
      %18 = sbr.rel (%p16) target = $region8
    $region5: #{tpu_custom_call.1} parent=1 // loop_body
      %s20 = ssub.s32 %s15, 1
      %s21 = ssub.s32 %s15, 2
      %s28 = sadd.s32 1, %s23
      %p29 = scmp.ge.s32.totalorder %s28, 1
      %s30 = scalar_select %p29, 0, %s28
      %s31 = sadd.s32 1, %s22
      %s32 = scalar_select %p29, %s31, %s22
      %p33 = scmp.ge.s32.totalorder %s32, 2
      %s34 = scalar_select %p33, 0, %s32
      %s35 = ssub.s32 %s22, %s34
      %s36 = ssub.s32 %s23, %s30
      %s37 = sor.u32 %s35, %s36
      %p38 = scmp.eq.s32.totalorder %s37, 0
      %s40 = sadd.s32 %s39, 1
      %s41 = scalar_select %p38, %s39, %s40
      %p44 = pneg %p38
      %p45 = scmp.eq.s32.totalorder %s15, 1
      %p46 = por %p44, %p45
      %p47 = scmp.ne.s32.totalorder %s39, %s42
      %p48 = scmp.eq.s32.totalorder %s15, 0
      %p49 = por %p47, %p48
      %p50 = scmp.ne.s32.totalorder %s39, %s42
      %p51 = scmp.eq.s32.totalorder %s20, 1
      %p52 = por %p50, %p51
      %p53 = scmp.ne.s32.totalorder %s42, %s43
      %p54 = scmp.eq.s32.totalorder %s20, 0
      %p55 = por %p53, %p54
      %p56 = scmp.ne.s32.totalorder %s42, %s43
      %p57 = scmp.eq.s32.totalorder %s21, 1
      %p58 = por %p56, %p57
      %p60 = scmp.ne.s32.totalorder %s43, %s59
      %p61 = scmp.eq.s32.totalorder %s21, 0
      %p62 = por %p60, %p61
      %s64 = sadd.s32 %s63, 1
      %p67 = scmp.eq.s32.totalorder %s15, 1
      %p68 = scmp.ne.s32.totalorder %s63, %s65
      %p69 = scmp.eq.s32.totalorder %s15, 0
      %p70 = por %p68, %p69
      %p71 = scmp.ne.s32.totalorder %s63, %s65
      %p72 = scmp.eq.s32.totalorder %s20, 1
      %p73 = por %p71, %p72
      %p74 = scmp.ne.s32.totalorder %s65, %s66
      %p75 = scmp.eq.s32.totalorder %s20, 0
      %p76 = por %p74, %p75
      %p77 = scmp.ne.s32.totalorder %s65, %s66
      %p78 = scmp.eq.s32.totalorder %s21, 1
      %p79 = por %p77, %p78
      %p81 = scmp.ne.s32.totalorder %s66, %s80
      %p82 = scmp.eq.s32.totalorder %s21, 0
      %p83 = por %p81, %p82
      %s85 = sadd.s32 %s84, 1
      %p88 = scmp.eq.s32.totalorder %s15, 1
      %p89 = scmp.ne.s32.totalorder %s84, %s86
      %p90 = scmp.eq.s32.totalorder %s15, 0
      %p91 = por %p89, %p90
      %p92 = scmp.ne.s32.totalorder %s84, %s86
      %p93 = scmp.eq.s32.totalorder %s20, 1
      %p94 = por %p92, %p93
      %p95 = scmp.ne.s32.totalorder %s86, %s87
      %p96 = scmp.eq.s32.totalorder %s20, 0
      %p97 = por %p95, %p96
      %p98 = scmp.ne.s32.totalorder %s86, %s87
      %p99 = scmp.eq.s32.totalorder %s21, 1
      %p100 = por %p98, %p99
      %p102 = scmp.ne.s32.totalorder %s87, %s101
      %p103 = scmp.eq.s32.totalorder %s21, 0
      %p104 = por %p102, %p103
      %s105 = ssub.s32 %s22, %s34
      %s106 = ssub.s32 %s23, %s30
      %s107 = sor.u32 %s105, %s106
      %p108 = scmp.eq.s32.totalorder %s107, 0
      %s110 = sadd.s32 %s109, 1
      %s111 = scalar_select %p108, %s109, %s110
      %p114 = pneg %p108
      %p115 = scmp.eq.s32.totalorder %s15, 1
      %p116 = por %p114, %p115
      %p117 = scmp.ne.s32.totalorder %s109, %s112
      %p118 = scmp.eq.s32.totalorder %s15, 0
      %p119 = por %p117, %p118
      %p120 = scmp.ne.s32.totalorder %s109, %s112
      %p121 = scmp.eq.s32.totalorder %s20, 1
      %p122 = por %p120, %p121
      %p123 = scmp.ne.s32.totalorder %s112, %s113
      %p124 = scmp.eq.s32.totalorder %s20, 0
      %p125 = por %p123, %p124
      %p126 = scmp.ne.s32.totalorder %s112, %s113
      %p127 = scmp.eq.s32.totalorder %s21, 1
      %p128 = por %p126, %p127
      %p130 = scmp.ne.s32.totalorder %s113, %s129
      %p131 = scmp.eq.s32.totalorder %s21, 0
      %p132 = por %p130, %p131
      %p133 = scmp.le.s32.totalorder 1, %s15
      %p134 = scmp.lt.s32.totalorder %s15, 3
      %p135 = pnand %p133, %p134
      %p136 = pneg %p135
      // Predicated region
      $region9: #{tpu_custom_call.1} parent=5 // pred_check
        _
      $region10: #{tpu_custom_call.1} parent=5 // pred_check_branch
        %138 = sbr.rel (%p135) target = $region12
      $region11: #{tpu_custom_call.1} parent=5 // pred_region
        %s139 = ssub.s32 %s15, 1
        // Predicated region
        $region13: #{tpu_custom_call.1} parent=11 // pred_check
          %p140 = pneg %p76
        $region14: #{tpu_custom_call.1} parent=11 // pred_check_branch
          %142 = sbr.rel (%p140) target = $region16
        $region15: #{tpu_custom_call.1} parent=11 // pred_region
          _
        $region16: #{tpu_custom_call.1} parent=11 // pred_fallthru
          _
        // Predicated region
        $region17: #{tpu_custom_call.1} parent=11 // pred_check
          %p143 = pneg %p97
        $region18: #{tpu_custom_call.1} parent=11 // pred_check_branch
          %145 = sbr.rel (%p143) target = $region20
        $region19: #{tpu_custom_call.1} parent=11 // pred_region
          _
        $region20: #{tpu_custom_call.1} parent=11 // pred_fallthru
          _
      $region12: #{tpu_custom_call.1} parent=5 // pred_fallthru
        _
      %p146 = scmp.lt.s32.totalorder %s15, 2
      // Predicated region
      $region21: #{tpu_custom_call.1} parent=5 // pred_check
        %p147 = pneg %p146
      $region22: #{tpu_custom_call.1} parent=5 // pred_check_branch
        %149 = sbr.rel (%p147) target = $region24
      $region23: #{tpu_custom_call.1} parent=5 // pred_region
        // Predicated region
        $region25: #{tpu_custom_call.1} parent=23 // pred_check
          %p150 = pneg %p49
        $region26: #{tpu_custom_call.1} parent=23 // pred_check_branch
          %152 = sbr.rel (%p150) target = $region28
        $region27: #{tpu_custom_call.1} parent=23 // pred_region
          %s153 = sand.u32 %s39, 1
          %s154 = scalar_lea.sflag [#allocation3], %s153
          %s155 = sand.u32 %s39, 1
          %s156 = smul.addr %s155, 8
          %s157 = scalar_lea.vmem [#allocation2], %s156
          %s158 = smul.u32 2, %s23
          %160 = vsyncadd %s154, 0
          %s161 = smul.addr %s22, 2
          %s162 = sadd.s32 %s158, %s161
          %s163 = smul.addr %s162, 4
          %s164 = scalar_lea.hbm %s0, %s163
          %s166 = sshll.u32 %s164, 4
          %s167 = int_to_ptr.hbm [resolvable:$true] %s166
          %s168 = sshll.u32 %s157, 4
          %s169 = int_to_ptr.vmem [resolvable:$true] %s168
          %171 = dma.hbm_to_vmem [thread:$0]  %s167, 128, %s169, %s154
        $region28: #{tpu_custom_call.1} parent=23 // pred_fallthru
          _
      $region24: #{tpu_custom_call.1} parent=5 // pred_fallthru
        _
      %p172 = scmp.le.s32.totalorder 1, %s15
      %p173 = scmp.lt.s32.totalorder %s15, 3
      %p174 = pnand %p172, %p173
      %p175 = pneg %p174
      // Predicated region
      $region29: #{tpu_custom_call.1} parent=5 // pred_check
        _
      $region30: #{tpu_custom_call.1} parent=5 // pred_check_branch
        %177 = sbr.rel (%p174) target = $region32
      $region31: #{tpu_custom_call.1} parent=5 // pred_region
        %s178 = ssub.s32 %s15, 1
        %s179 = sand.u32 %s42, 1
        %s180 = scalar_lea.sflag [#allocation3], %s179
        %s181 = sand.u32 %s42, 1
        %s182 = smul.addr %s181, 8
        %s183 = scalar_lea.vmem [#allocation2], %s182
        // Predicated region
        $region33: #{tpu_custom_call.1} parent=31 // pred_check
          %p184 = pneg %p55
        $region34: #{tpu_custom_call.1} parent=31 // pred_check_branch
          %186 = sbr.rel (%p184) target = $region36
        $region35: #{tpu_custom_call.1} parent=31 // pred_region
          %188 = dma.done %s180, 128
        $region36: #{tpu_custom_call.1} parent=31 // pred_fallthru
          _
        %s189 = sand.u32 %s42, 1
        %s190 = scalar_lea.sflag [#allocation3], %s189
        %s191 = sand.u32 %s42, 1
        %s192 = smul.addr %s191, 8
        %s193 = scalar_lea.vmem [#allocation2], %s192
        %p194 = pneg %p55
        %p195 = pneg %p52
        %p196 = pneg %p76
        %p197 = pneg %p73
        %p198 = pneg %p97
        %p199 = pneg %p94
        %p200 = pneg %p125
        %p201 = pneg %p122
        %s202 = sand.u32 %s112, 1
        %s203 = scalar_lea.sflag [#allocation4], %s202
        %s204 = sand.u32 %s112, 1
        %s205 = smul.addr %s204, 8
        %s206 = scalar_lea.vmem [#allocation5], %s205
        %s207 = smul.u32 2, %s25
        %s208 = smul.u32 2, %s25
        %v209 = vld [vmem:[%s183] sm:$0xff]
        %v210 = vld [vmem:[%s1] sm:$0xf]
        %v211 = vld [vmem:[%s2] sm:$0xf]
        %213 = vst [vmem:[#allocation1] ss:$2 sm:$0xff] %v209
        %v214 = vld.sshfl [vmem:[#allocation1] sm:$0xff pattern:$0x75316420]
        %v215 = vld.sshfl [vmem:[#allocation1 + $0x8] sm:$0xff pattern:$0x75316420]
        %vm218 = vcmask 1043456
        %v219 = vsel %vm218, %v214, 0.0
        %v220 = vrot.slane %v219, 4
        %v221 = vadd.f32 %v219, %v220
        %v222 = vrot.slane %v221, 2
        %v223 = vadd.f32 %v221, %v222
        %v224 = vrot.slane %v223, 1
        %v225 = vadd.f32 %v223, %v224
        %v226 = vsel %vm218, %v215, 0.0
        %v227 = vrot.slane %v226, 4
        %v228 = vadd.f32 %v226, %v227
        %v229 = vrot.slane %v228, 2
        %v230 = vadd.f32 %v228, %v229
        %v231 = vrot.slane %v230, 1
        %v232 = vadd.f32 %v230, %v231
        %v233 = vmul.f32 %v209, %v209
        %235 = vst [vmem:[#allocation1] ss:$2 sm:$0xff] %v233
        %v236 = vld.sshfl [vmem:[#allocation1] sm:$0xff pattern:$0x75316420]
        %v237 = vld.sshfl [vmem:[#allocation1 + $0x8] sm:$0xff pattern:$0x75316420]
        %v240 = vsel %vm218, %v236, 0.0
        %v241 = vrot.slane %v240, 4
        %v242 = vadd.f32 %v240, %v241
        %v243 = vrot.slane %v242, 2
        %v244 = vadd.f32 %v242, %v243
        %v245 = vrot.slane %v244, 1
        %v246 = vadd.f32 %v244, %v245
        %v247 = vsel %vm218, %v237, 0.0
        %v248 = vrot.slane %v247, 4
        %v249 = vadd.f32 %v247, %v248
        %v250 = vrot.slane %v249, 2
        %v251 = vadd.f32 %v249, %v250
        %v252 = vrot.slane %v251, 1
        %v253 = vadd.f32 %v251, %v252
        %v254 = vmul.f32 %v225, 0.25
        %v255 = vmul.f32 %v232, 0.25
        %v256 = vmul.f32 %v246, 0.25
        %v257 = vmul.f32 %v253, 0.25
        %v258 = vmul.f32 %v254, %v254
        %v259 = vmul.f32 %v255, %v255
        %v260 = vsub.f32 %v256, %v258
        %v261 = vsub.f32 %v257, %v259
        %v262 = vmax.f32 %v260, 0.0
        %v263 = vmax.f32 %v261, 0.0
        %v264 = vadd.f32 %v262, 1e-06
        %v265 = vadd.f32 %v263, 1e-06
        %v266 = vrsqrt.pop %v264
        %v267 = vmul.f32 %v266, %v264
        %v268 = vmul.f32 %v267, %v266
        %v269 = vmul.f32 0.5, %v268
        %v270 = vsub.f32 1.5, %v269
        %v271 = vmul.f32 %v266, %v270
        %vm272 = vweird.f32 %v264
        %vm273 = vweird.f32 %v266
        %vm274 = vmor %vm272, %vm273
        %v275 = vsel %vm274, %v266, %v271
        %v276 = vrsqrt.pop %v265
        %v277 = vmul.f32 %v276, %v265
        %v278 = vmul.f32 %v277, %v276
        %v279 = vmul.f32 0.5, %v278
        %v280 = vsub.f32 1.5, %v279
        %v281 = vmul.f32 %v276, %v280
        %vm282 = vweird.f32 %v265
        %vm283 = vweird.f32 %v276
        %vm284 = vmor %vm282, %vm283
        %v285 = vsel %vm284, %v276, %v281
        %v288 = vrot.slane %v255, 4
        %v289 = vsel %vm218, %v254, %v288
        %v291 = vsub.f32 %v209, %v289
        %v294 = vrot.slane %v285, 4
        %v295 = vsel %vm218, %v275, %v294
        %v297 = vmul.f32 %v291, %v295
        %299 = vset.pattern.permute.xlu0 0
        %300 = vperm.xlu0 %299, %v210
        %v301 = vpop.permute.xlu0 %300
        %304 = vst [vmem:[#allocation1] ss:$2 sm:$0xff] %v297
        %v305 = vld.sshfl [vmem:[#allocation1] sm:$0xff pattern:$0x75316420]
        %v306 = vld.sshfl [vmem:[#allocation1 + $0x8] sm:$0xff pattern:$0x75316420]
        %v309 = vmul.f32 %v301, %v305
        %v310 = vmul.f32 %v301, %v306
        %312 = vset.pattern.permute.xlu0 0
        %313 = vperm.xlu0 %312, %v211
        %v314 = vpop.permute.xlu0 %313
        %v316 = vadd.f32 %v309, %v314
        %v317 = vadd.f32 %v310, %v314
        %v320 = vrot.slane %v317, 4
        %v321 = vsel %vm218, %v316, %v320
        %323 = vst [vmem:[%s206] sm:$0xff] %v321
        %s324 = sand.u32 %s112, 1
        %s325 = scalar_lea.sflag [#allocation4], %s324
        %s326 = sand.u32 %s112, 1
        %s327 = smul.addr %s326, 8
        %s328 = scalar_lea.vmem [#allocation5], %s327
        // Predicated region
        $region37: #{tpu_custom_call.1} parent=31 // pred_check
          %p329 = pneg %p122
        $region38: #{tpu_custom_call.1} parent=31 // pred_check_branch
          %331 = sbr.rel (%p329) target = $region40
        $region39: #{tpu_custom_call.1} parent=31 // pred_region
          %s332 = smul.u32 2, %s25
          %334 = vsyncadd %s325, 0
          %s335 = smul.addr %s24, 2
          %s336 = sadd.s32 %s332, %s335
          %s337 = smul.addr %s336, 4
          %s338 = scalar_lea.hbm %s3, %s337
          %s340 = sshll.u32 %s328, 4
          %s341 = int_to_ptr.vmem [resolvable:$true] %s340
          %s342 = sshll.u32 %s338, 4
          %s343 = int_to_ptr.hbm [resolvable:$true] %s342
          %345 = dma.vmem_to_hbm [thread:$0]  %s341, 128, %s343, %s325
        $region40: #{tpu_custom_call.1} parent=31 // pred_fallthru
          _
      $region32: #{tpu_custom_call.1} parent=5 // pred_fallthru
        _
      %p346 = scmp.le.s32.totalorder 2, %s15
      // Predicated region
      $region41: #{tpu_custom_call.1} parent=5 // pred_check
        %p347 = pneg %p346
      $region42: #{tpu_custom_call.1} parent=5 // pred_check_branch
        %349 = sbr.rel (%p347) target = $region44
      $region43: #{tpu_custom_call.1} parent=5 // pred_region
        %s350 = ssub.s32 %s15, 2
        // Predicated region
        $region45: #{tpu_custom_call.1} parent=43 // pred_check
          %p351 = pneg %p128
        $region46: #{tpu_custom_call.1} parent=43 // pred_check_branch
          %353 = sbr.rel (%p351) target = $region48
        $region47: #{tpu_custom_call.1} parent=43 // pred_region
          %s354 = sand.u32 %s113, 1
          %s355 = scalar_lea.sflag [#allocation4], %s354
          %s356 = sand.u32 %s113, 1
          %s357 = smul.addr %s356, 8
          %s358 = scalar_lea.vmem [#allocation5], %s357
          %360 = dma.done %s355, 128
        $region48: #{tpu_custom_call.1} parent=43 // pred_fallthru
          _
      $region44: #{tpu_custom_call.1} parent=5 // pred_fallthru
        _
    $region6: #{tpu_custom_call.1} parent=1 // loop_footer
      %s19 = sadd.s32 1, %s15
    $region7: #{tpu_custom_call.1} parent=1 // loop_footer_branch
      %14 = sbr.rel target = $region3
    $region8: #{tpu_custom_call.1} parent=1 // loop_exit
      _
    %361 = vsyncpa [#allocation3], 1
    %s362 = scalar_lea.sflag [#allocation3], 1
    %363 = vsyncpa %s362, 1
    %364 = vsyncpa [#allocation4], 1
    %s365 = scalar_lea.sflag [#allocation4], 1
    %366 = vsyncpa %s365, 1

</llo_original>
